<compile_context>
chip_gen: v7x
topology: tpu7x:2x2x1
jax: 0.10.0
libtpu: 0.0.40
codegen_flags: <defaults>
</compile_context>

<pallas_src>
import functools

import jax
import jax.numpy as jnp
from jax import lax
from jax.experimental import pallas as pl
from jax.experimental.pallas import tpu as pltpu


def _round_up(x, m):
    return (x + m - 1) // m * m


# ----------------------------- Pallas kernel --------------------------------
def _bce_with_logits_kernel(p_ref, lab_ref, w_ref, pw_ref, o_ref, acc_ref,
                            *, n_rows, denom):
    # p_ref:   (TB, CP) f32 logits tile (channels zero-padded to CP)
    # lab_ref: (TB, 1)  i32 class index per row (padded rows hold 0, masked)
    # w_ref:   (1, CP)  per-class loss weight   (0 in padded columns)
    # pw_ref:  (1, CP)  per-class pos_weight
    # o_ref:   (1, 1)   scalar mean loss
    # acc_ref: (1, CP)  f32 lane-wide running column sums (VMEM scratch)
    i = pl.program_id(0)

    @pl.when(i == 0)
    def _init():
        acc_ref[...] = jnp.zeros_like(acc_ref)

    x = p_ref[...]                                   # (TB, CP)
    lab = lab_ref[...]                               # (TB, 1)
    tb, cp = x.shape

    col = lax.broadcasted_iota(jnp.int32, (tb, cp), 1)
    row = lax.broadcasted_iota(jnp.int32, (tb, cp), 0) + i * tb
    valid = row < n_rows                             # mask padded rows

    y = jnp.where(col == lab, 1.0, 0.0)              # one-hot target
    w = w_ref[...]                                   # (1, CP) broadcast
    pw = pw_ref[...]                                 # (1, CP) broadcast

    # PyTorch BCEWithLogitsLoss (numerically stable):
    #   l = (1 - y)*x + (1 + (pw - 1)*y) * softplus(-x)
    #   softplus(-x) = max(-x, 0) + log1p(exp(-|x|))
    sp = jnp.maximum(-x, 0.0) + jnp.log1p(jnp.exp(-jnp.abs(x)))
    log_weight = 1.0 + (pw - 1.0) * y
    loss = ((1.0 - y) * x + log_weight * sp) * w
    loss = jnp.where(valid, loss, 0.0)

    # Only a sublane reduction per tile; cross-lane reduce deferred to finalize.
    acc_ref[...] += jnp.sum(loss, axis=0, keepdims=True)

    @pl.when(i == pl.num_programs(0) - 1)
    def _finalize():
        total = jnp.sum(acc_ref[...], axis=1, keepdims=True)   # (1, 1)
        o_ref[...] = total * (1.0 / denom)                     # mean over B*C


# ------------------------------- wrapper -------------------------------------
@functools.partial(jax.jit, static_argnames=("tile_rows",))
def compute_loss(p, labels, weight, pos_weight, *, tile_rows=512):
    """Equivalent of ComputeLoss.forward: returns (loss, loss.detach())."""
    p = p.astype(jnp.float32)
    B, C = p.shape

    CP = _round_up(C, 128)                 # lane-dense channel slab
    TB = min(_round_up(B, 8), tile_rows)   # sublane-aligned row tile
    BP = _round_up(B, TB)
    grid = (BP // TB,)

    labels_i32 = labels.astype(jnp.int32).reshape(B, 1)
    weight_f = weight.astype(jnp.float32).reshape(1, C)
    pos_weight_f = pos_weight.astype(jnp.float32).reshape(1, C)

    # Pad only when actually needed (static shapes -> free to decide here).
    p_pad = p if (BP == B and CP == C) else jnp.pad(p, ((0, BP - B), (0, CP - C)))
    lab_pad = labels_i32 if BP == B else jnp.pad(labels_i32, ((0, BP - B), (0, 0)))
    w_pad = weight_f if CP == C else jnp.pad(weight_f, ((0, 0), (0, CP - C)))
    pw_pad = pos_weight_f if CP == C else jnp.pad(pos_weight_f, ((0, 0), (0, CP - C)))

    kernel = functools.partial(
        _bce_with_logits_kernel, n_rows=B, denom=float(B * C))

    out = pl.pallas_call(
        kernel,
        out_shape=jax.ShapeDtypeStruct((1, 1), jnp.float32),
        grid_spec=pltpu.PrefetchScalarGridSpec(
            num_scalar_prefetch=0,
            grid=grid,
            in_specs=[
                pl.BlockSpec((TB, CP), lambda i: (i, 0)),
                pl.BlockSpec((TB, 1), lambda i: (i, 0)),
                pl.BlockSpec((1, CP), lambda i: (0, 0)),
                pl.BlockSpec((1, CP), lambda i: (0, 0)),
            ],
            out_specs=pl.BlockSpec((1, 1), lambda i: (0, 0)),
            scratch_shapes=[pltpu.VMEM((1, CP), jnp.float32)],
        ),
        compiler_params=pltpu.CompilerParams(
            dimension_semantics=("arbitrary",),   # reduction over row tiles
        ),
    )(p_pad, lab_pad, w_pad, pw_pad)

    loss = out[0, 0]
    return loss, lax.stop_gradient(loss)          # (loss, loss.detach())


# --------------------------- pure-JAX reference ------------------------------
def _ref_compute_loss(p, labels, weight, pos_weight):
    B, C = p.shape
    y = jax.nn.one_hot(labels, C, dtype=jnp.float32)
    sp = jnp.maximum(-p, 0.0) + jnp.log1p(jnp.exp(-jnp.abs(p)))
    log_weight = 1.0 + (pos_weight - 1.0) * y
    loss = ((1.0 - y) * p + log_weight * sp) * weight
    return jnp.mean(loss)


# ---------------------------------- main -------------------------------------
if __name__ == "__main__":
    key = jax.random.PRNGKey(0)

    weight = jnp.array([0.2, 1.0, 0.8], jnp.float32)
    pos_weight = jnp.array([0.5, 1.0, 1.0], jnp.float32)

    # small shapes consistent with the module: 3 classes (len(weight)==3)
    for B in (8, 37):                       # 37 exercises the row-mask path
        k_p, k_l, key = jax.random.split(key, 3)
        p = jax.random.normal(k_p, (B, 3), jnp.float32)
        labels = jax.random.randint(k_l, (B,), 0, 3, dtype=jnp.int32)

        loss, loss_det = compute_loss(p, labels, weight, pos_weight)
        loss = jax.block_until_ready(loss)

        ref = _ref_compute_loss(p, labels, weight, pos_weight)
        assert abs(float(loss) - float(ref)) < 1e-5, (B, float(loss), float(ref))
        assert abs(float(loss_det) - float(ref)) < 1e-5

    print("KERNEL_OK")
</pallas_src>

<mosaic_0001>
module attributes {stable_mosaic.version = 11 : i64} {
  func.func @_bce_with_logits_kernel(%arg0: i32, %arg1: memref<8x128xf32, #tpu.memory_space<vmem>>, %arg2: memref<8x1xi32, #tpu.memory_space<vmem>>, %arg3: memref<1x128xf32, #tpu.memory_space<vmem>>, %arg4: memref<1x128xf32, #tpu.memory_space<vmem>>, %arg5: memref<1x1xf32, #tpu.memory_space<vmem>>, %arg6: memref<1x128xf32, #tpu.memory_space<vmem>>) attributes {dimension_semantics = [#tpu.dimension_semantics<arbitrary>], iteration_bounds = array<i64: 1>, scalar_prefetch = 0 : i64, scratch_operands = 1 : i64, tpu.core_type = #tpu.core_type<tc>, window_params = [{transform_indices = @transform_0, window_bounds = array<i64: 8, 128>}, {transform_indices = @transform_1, window_bounds = array<i64: 8, 1>}, {pipeline_mode = #tpu.pipeline_mode<synchronous>, transform_indices = @transform_2, window_bounds = array<i64: 1, 128>}, {pipeline_mode = #tpu.pipeline_mode<synchronous>, transform_indices = @transform_3, window_bounds = array<i64: 1, 128>}, {pipeline_mode = #tpu.pipeline_mode<synchronous>, transform_indices = @transform_4, window_bounds = array<i64: 1, 1>}]} {
    %c0_i32 = arith.constant 0 : i32
    %0 = arith.cmpi eq, %arg0, %c0_i32 : i32
    %1 = arith.extui %0 : i1 to i32
    %c0_i32_0 = arith.constant 0 : i32
    %2 = arith.cmpi ne, %1, %c0_i32_0 : i32
    scf.if %2 {
      %cst_24 = arith.constant 0.000000e+00 : f32
      %52 = vector.broadcast %cst_24 : f32 to vector<1x128xf32>
      %c0_25 = arith.constant 0 : index
      %c0_26 = arith.constant 0 : index
      %53 = vector.load %arg6[%c0_25, %c0_26] : memref<1x128xf32, #tpu.memory_space<vmem>>, vector<1x128xf32>
      tpu.vector_store %arg6[%c0_25, %c0_26], %52 {strides = array<i32>} : memref<1x128xf32, #tpu.memory_space<vmem>>, vector<1x128xf32>,
    } else {
    }
    %c0 = arith.constant 0 : index
    %c0_1 = arith.constant 0 : index
    %3 = vector.load %arg1[%c0, %c0_1] : memref<8x128xf32, #tpu.memory_space<vmem>>, vector<8x128xf32>
    %c0_2 = arith.constant 0 : index
    %c0_3 = arith.constant 0 : index
    %4 = vector.load %arg2[%c0_2, %c0_3] : memref<8x1xi32, #tpu.memory_space<vmem>>, vector<8x1xi32>
    %5 = tpu.iota {dimensions = array<i32: 1>} : vector<8x128xi32>
    %6 = tpu.iota {dimensions = array<i32: 0>} : vector<8x128xi32>
    %c8_i32 = arith.constant 8 : i32
    %7 = arith.muli %arg0, %c8_i32 : i32
    %8 = vector.broadcast %7 : i32 to vector<8x128xi32>
    %9 = arith.addi %6, %8 : vector<8x128xi32>
    %c8_i32_4 = arith.constant 8 : i32
    %10 = vector.broadcast %c8_i32_4 : i32 to vector<8x128xi32>
    %11 = arith.cmpi slt, %9, %10 : vector<8x128xi32>
    %12 = vector.broadcast %4 : vector<8x1xi32> to vector<8x128xi32>
    %13 = arith.cmpi eq, %5, %12 : vector<8x128xi32>
    %cst = arith.constant 1.000000e+00 : f32
    %cst_5 = arith.constant 0.000000e+00 : f32
    %14 = vector.broadcast %cst : f32 to vector<8x128xf32>
    %15 = vector.broadcast %cst_5 : f32 to vector<8x128xf32>
    %16 = arith.select %13, %14, %15 : vector<8x128xi1>, vector<8x128xf32>
    %c0_6 = arith.constant 0 : index
    %c0_7 = arith.constant 0 : index
    %17 = vector.load %arg3[%c0_6, %c0_7] : memref<1x128xf32, #tpu.memory_space<vmem>>, vector<1x128xf32>
    %c0_8 = arith.constant 0 : index
    %c0_9 = arith.constant 0 : index
    %18 = vector.load %arg4[%c0_8, %c0_9] : memref<1x128xf32, #tpu.memory_space<vmem>>, vector<1x128xf32>
    %cst_10 = arith.constant 0.000000e+00 : f32
    %19 = vector.broadcast %cst_10 : f32 to vector<8x128xf32>
    %20 = arith.subf %19, %3 : vector<8x128xf32>
    %cst_11 = arith.constant 0.000000e+00 : f32
    %21 = vector.broadcast %cst_11 : f32 to vector<8x128xf32>
    %22 = arith.maximumf %20, %21 : vector<8x128xf32>
    %23 = math.absf %3 : vector<8x128xf32>
    %cst_12 = arith.constant 0.000000e+00 : f32
    %24 = vector.broadcast %cst_12 : f32 to vector<8x128xf32>
    %25 = arith.subf %24, %23 : vector<8x128xf32>
    %26 = math.exp %25 : vector<8x128xf32>
    %27 = math.log1p %26 : vector<8x128xf32>
    %28 = arith.addf %22, %27 : vector<8x128xf32>
    %cst_13 = arith.constant 1.000000e+00 : f32
    %29 = vector.broadcast %cst_13 : f32 to vector<1x128xf32>
    %30 = arith.subf %18, %29 : vector<1x128xf32>
    %31 = vector.broadcast %30 : vector<1x128xf32> to vector<8x128xf32>
    %32 = arith.mulf %31, %16 : vector<8x128xf32>
    %cst_14 = arith.constant 1.000000e+00 : f32
    %33 = vector.broadcast %cst_14 : f32 to vector<8x128xf32>
    %34 = arith.addf %33, %32 : vector<8x128xf32>
    %cst_15 = arith.constant 1.000000e+00 : f32
    %35 = vector.broadcast %cst_15 : f32 to vector<8x128xf32>
    %36 = arith.subf %35, %16 : vector<8x128xf32>
    %37 = arith.mulf %36, %3 : vector<8x128xf32>
    %38 = arith.mulf %34, %28 : vector<8x128xf32>
    %39 = arith.addf %37, %38 : vector<8x128xf32>
    %40 = vector.broadcast %17 : vector<1x128xf32> to vector<8x128xf32>
    %41 = arith.mulf %39, %40 : vector<8x128xf32>
    %cst_16 = arith.constant 0.000000e+00 : f32
    %42 = vector.broadcast %cst_16 : f32 to vector<8x128xf32>
    %43 = arith.select %11, %41, %42 : vector<8x128xi1>, vector<8x128xf32>
    %c0_17 = arith.constant 0 : index
    %c0_18 = arith.constant 0 : index
    %44 = vector.load %arg6[%c0_17, %c0_18] : memref<1x128xf32, #tpu.memory_space<vmem>>, vector<1x128xf32>
    %cst_19 = arith.constant dense<0.000000e+00> : vector<128xf32>
    %45 = vector.multi_reduction <add>, %43, %cst_19 [0] : vector<8x128xf32> to vector<128xf32>
    %46 = vector.shape_cast %45 : vector<128xf32> to vector<1x128xf32>
    %47 = arith.addf %44, %46 : vector<1x128xf32>
    %c0_20 = arith.constant 0 : index
    %c0_21 = arith.constant 0 : index
    %48 = vector.load %arg6[%c0_20, %c0_21] : memref<1x128xf32, #tpu.memory_space<vmem>>, vector<1x128xf32>
    tpu.vector_store %arg6[%c0_20, %c0_21], %47 {strides = array<i32>} : memref<1x128xf32, #tpu.memory_space<vmem>>, vector<1x128xf32>,
    %c0_i32_22 = arith.constant 0 : i32
    %49 = arith.cmpi eq, %arg0, %c0_i32_22 : i32
    %50 = arith.extui %49 : i1 to i32
    %c0_i32_23 = arith.constant 0 : i32
    %51 = arith.cmpi ne, %50, %c0_i32_23 : i32
    scf.if %51 {
      %c0_24 = arith.constant 0 : index
      %c0_25 = arith.constant 0 : index
      %52 = vector.load %arg6[%c0_24, %c0_25] : memref<1x128xf32, #tpu.memory_space<vmem>>, vector<1x128xf32>
      %cst_26 = arith.constant dense<0.000000e+00> : vector<1xf32>
      %53 = vector.multi_reduction <add>, %52, %cst_26 [1] : vector<1x128xf32> to vector<1xf32>
      %54 = vector.shape_cast %53 : vector<1xf32> to vector<1x1xf32>
      %cst_27 = arith.constant 0.0416666679 : f32
      %55 = vector.broadcast %cst_27 : f32 to vector<1x1xf32>
      %56 = arith.mulf %54, %55 : vector<1x1xf32>
      %c0_28 = arith.constant 0 : index
      %c0_29 = arith.constant 0 : index
      %57 = vector.load %arg5[%c0_28, %c0_29] : memref<1x1xf32, #tpu.memory_space<vmem>>, vector<1x1xf32>
      tpu.vector_store %arg5[%c0_28, %c0_29], %56 {strides = array<i32>} : memref<1x1xf32, #tpu.memory_space<vmem>>, vector<1x1xf32>,
    } else {
    }
    return
  }
  func.func @transform_0(%arg0: i32) -> (i32, i32) {
    %c0_i32 = arith.constant 0 : i32
    %c0_i32_0 = arith.constant 0 : i32
    return %arg0, %c0_i32 : i32, i32
  }
  func.func @transform_1(%arg0: i32) -> (i32, i32) {
    %c0_i32 = arith.constant 0 : i32
    %c0_i32_0 = arith.constant 0 : i32
    return %arg0, %c0_i32 : i32, i32
  }
  func.func @transform_2(%arg0: i32) -> (i32, i32) {
    %c0_i32 = arith.constant 0 : i32
    %c0_i32_0 = arith.constant 0 : i32
    %c0_i32_1 = arith.constant 0 : i32
    return %c0_i32, %c0_i32_0 : i32, i32
  }
  func.func @transform_3(%arg0: i32) -> (i32, i32) {
    %c0_i32 = arith.constant 0 : i32
    %c0_i32_0 = arith.constant 0 : i32
    %c0_i32_1 = arith.constant 0 : i32
    return %c0_i32, %c0_i32_0 : i32, i32
  }
  func.func @transform_4(%arg0: i32) -> (i32, i32) {
    %c0_i32 = arith.constant 0 : i32
    %c0_i32_0 = arith.constant 0 : i32
    %c0_i32_1 = arith.constant 0 : i32
    return %c0_i32, %c0_i32_0 : i32, i32
  }
}

</mosaic_0001>

<llo_original>
// kernel: compute_loss.1
$region0: #{compute_loss.1}
  #allocation0 [shape = 'u32[]', space=smem, size = 0x4, offset = 0x4, fixed_abs, tag = 'smem constant byte address 0x4 - core index']
  #allocation1 [shape = 'u32[144,128]{1,0:T(1,128)}', space=vmem, size = 0x12000, scoped, tag = 'internal scratch']
  #allocation2 [shape = 'f32[1,128]{1,0:T(1,128)}', space=vmem, size = 0x200, scoped, tag = 'scratch operand']
  %s0 = inlined_call_operand.vmem [shape: f32[8,128], index: 0, kind: input, shape index: {}]
  %s1 = inlined_call_operand.vmem [shape: s32[8,1], index: 1, kind: input, shape index: {}]
  %s2 = inlined_call_operand.vmem [shape: f32[1,128], index: 2, kind: input, shape index: {}]
  %s3 = inlined_call_operand.vmem [shape: f32[1,128], index: 3, kind: input, shape index: {}]
  %s4 = inlined_call_operand.hbm [shape: f32[1,1], index: 4, kind: output, shape index: {}]
  %s5 = sld [smem:[#allocation0]]
  $region34: #{compute_loss.1} parent=0
    _
  %s7 = ssub.s32 1, %s5
  %s8 = scalar_select 0, %s7, %s5
  $region1: #{compute_loss.1} parent=0
    #allocation3 [shape = 'u8[512]{0}', space=vmem, size = 0x400, scoped, tag = 'output window, operand 0, single buffered']
    #allocation4 [shape = 's32[1]{0}', space=sflag, size = 0x4, scoped, tag = 'scoped memory for compute_loss.1']
    %9 = vsyncpa [#allocation4], 0
    // Predicated region
    $region2: #{compute_loss.1} parent=1 // pred_check
      _
    $region3: #{compute_loss.1} parent=1 // pred_check_branch
      %11 = sbr.rel (0) target = $region5
    $region4: #{compute_loss.1} parent=1 // pred_region
      _
    $region5: #{compute_loss.1} parent=1 // pred_fallthru
      _
    // Predicated region
    $region6: #{compute_loss.1} parent=1 // pred_check
      _
    $region7: #{compute_loss.1} parent=1 // pred_check_branch
      %13 = sbr.rel (0) target = $region9
    $region8: #{compute_loss.1} parent=1 // pred_region
      _
    $region9: #{compute_loss.1} parent=1 // pred_fallthru
      _
    // Predicated region
    $region10: #{compute_loss.1} parent=1 // pred_check
      _
    $region11: #{compute_loss.1} parent=1 // pred_check_branch
      %15 = sbr.rel (0) target = $region13
    $region12: #{compute_loss.1} parent=1 // pred_region
      _
    $region13: #{compute_loss.1} parent=1 // pred_fallthru
      _
    // Predicated region
    $region14: #{compute_loss.1} parent=1 // pred_check
      _
    $region15: #{compute_loss.1} parent=1 // pred_check_branch
      %17 = sbr.rel (0) target = $region17
    $region16: #{compute_loss.1} parent=1 // pred_region
      _
    $region17: #{compute_loss.1} parent=1 // pred_fallthru
      _
    %p18 = scmp.eq.s32.totalorder 0, 0
    // Predicated region
    $region18: #{compute_loss.1} parent=1 // pred_check
      %p19 = pneg %p18
    $region19: #{compute_loss.1} parent=1 // pred_check_branch
      %21 = sbr.rel (%p19) target = $region21
    $region20: #{compute_loss.1} parent=1 // pred_region
      %22 = vst [vmem:[#allocation2] sm:$0x1] 0.0
    $region21: #{compute_loss.1} parent=1 // pred_fallthru
      _
    %v23 = vld [vmem:[%s0] sm:$0xff]
    %v24 = vld [vmem:[%s1] sm:$0xff]
    %v25 = vlaneseq
    %v26 = vand.u32 %v25, 127
    %v27 = vlaneseq
    %v28 = vshrl.u32 %v27, 7
    %s29 = smul.u32 0, 8
    %v30 = vstv %s29
    %v31 = vadd.s32 %v28, %v30
    %vm32 = vcmp.lt.s32.totalorder %v31, 8
    %33 = vset.pattern.permute.xlu0 0
    %34 = vperm.xlu0 %33, %v24
    %v35 = vpop.permute.xlu0 %34
    %vm36 = vcmp.eq.s32.totalorder %v26, %v35
    %v37 = vsel %vm36, 1.0, 0.0
    %v38 = vld [vmem:[%s2] sm:$0x1]
    %v39 = vld [vmem:[%s3] sm:$0x1]
    %v40 = vsub.f32 0.0, %v23
    %v41 = vmax.f32 %v40, 0.0
    %v42 = vand.u32 2147483647, %v23
    %v43 = vsub.f32 0.0, %v42
    %v44 = vmul.f32 %v43, 1.442695
    %v45 = vpow.pop %v44
    %v46 = vadd.f32 %v45, 1.0
    %v47 = vlog2.pop %v46
    %v48 = vmul.f32 %v47, 0.6931472
    %v49 = vmul.f32 -0.5, %v45
    %v50 = vadd.f32 %v49, 1.0
    %v51 = vmul.f32 %v50, %v45
    %v52 = vand.u32 2147483647, %v45
    %vm53 = vcmp.lt.f32.partialorder %v52, 0.0004427343
    %v54 = vsel %vm53, %v51, %v48
    %v55 = vadd.f32 %v41, %v54
    %v56 = vsub.f32 %v39, 1.0
    %v58 = vlaneseq
    %v59 = vshrl.u32 %v58, 7
    %v60 = vsub.s32 0, %v59
    %v61 = vrot.slane %v56, %v60
    %v63 = vmul.f32 %v61, %v37
    %v64 = vadd.f32 %v63, 1.0
    %v65 = vsub.f32 1.0, %v37
    %v66 = vmul.f32 %v65, %v23
    %v67 = vmul.f32 %v64, %v55
    %v68 = vadd.f32 %v66, %v67
    %v70 = vlaneseq
    %v71 = vshrl.u32 %v70, 7
    %v72 = vsub.s32 0, %v71
    %v73 = vrot.slane %v38, %v72
    %v75 = vmul.f32 %v68, %v73
    %v76 = vsel %vm32, %v75, 0.0
    %v77 = vld [vmem:[#allocation2] sm:$0x1]
    %v78 = vrot.slane %v76, 4
    %v79 = vadd.f32 %v76, %v78
    %v80 = vrot.slane %v79, 2
    %v81 = vadd.f32 %v79, %v80
    %v82 = vrot.slane %v81, 1
    %v83 = vadd.f32 %v81, %v82
    %v84 = vadd.f32 %v77, %v83
    %85 = vst [vmem:[#allocation2] sm:$0x1] %v84
    // Predicated region
    $region22: #{compute_loss.1} parent=1 // pred_check
      %p86 = pneg %p18
    $region23: #{compute_loss.1} parent=1 // pred_check_branch
      %88 = sbr.rel (%p86) target = $region25
    $region24: #{compute_loss.1} parent=1 // pred_region
      %v89 = vld [vmem:[#allocation2] sm:$0x1]
      %vm90 = vcmask 1040384
      %v91 = vsel %vm90, %v89, 0.0
      %92 = vadd.xlane.f32.xlu0 %v91
      %v93 = vpop.xlane.xlu0 %92
      %v94 = vmul.f32 %v93, 0.041666668
      %vm95 = vcmask 0
      %96 = vst.msk [vmem:[#allocation3] sm:$0x1] %vm95, %v94
    $region25: #{compute_loss.1} parent=1 // pred_fallthru
      _
    // Predicated region
    $region26: #{compute_loss.1} parent=1 // pred_check
      _
    $region27: #{compute_loss.1} parent=1 // pred_check_branch
      %98 = sbr.rel (0) target = $region29
    $region28: #{compute_loss.1} parent=1 // pred_region
      %s100 = ssub.s32 16, 16
      %101 = vsyncadd [#allocation4], %s100
      %s103 = sshll.u32 [#allocation3], 4
      %s104 = int_to_ptr.vmem [resolvable:$true] %s103
      %106 = dma.vmem_to_hbm [thread:$0]  %s104, 16, %s4, [#allocation4]
    $region29: #{compute_loss.1} parent=1 // pred_fallthru
      _
    // Predicated region
    $region30: #{compute_loss.1} parent=1 // pred_check
      _
    $region31: #{compute_loss.1} parent=1 // pred_check_branch
      %108 = sbr.rel (0) target = $region33
    $region32: #{compute_loss.1} parent=1 // pred_region
      %109 = dma.done [#allocation4], 16
    $region33: #{compute_loss.1} parent=1 // pred_fallthru
      _
    %110 = vsyncpa [#allocation4], 1

</llo_original>
